<compile_context>
chip_gen: v7x
topology: tpu7x:2x2x1
jax: 0.10.0
libtpu: 0.0.40
codegen_flags: <defaults>
</compile_context>

<pallas_src>
import jax
import jax.numpy as jnp
from jax.experimental import pallas as pl
from jax.experimental.pallas import tpu as pltpu

DROPOUT_P = 0.2
# Keep element iff the top-24 hash bits are >= p * 2^24  (P(keep) = 1 - p).
_KEEP_THRESHOLD = int(DROPOUT_P * (1 << 24))


def _round_up(n, m):
    return ((n + m - 1) // m) * m


def mlp_kernel(seed_ref,                      # SMEM (scalar prefetch): dropout seed
               x_ref,                         # (TB, IN)   bf16, streamed per tile
               ws_ref, bs_ref,                # (IN, U)    bf16, (1, U) f32
               w2_ref, b2_ref,                # (U, U)     bf16, (1, U) f32
               w3_ref, b3_ref,                # (U, U)     bf16 (pre-scaled by 1/(1-p)), (1, U) f32
               we_ref, be_ref,                # (U, OUT)   bf16, (1, OUT) f32
               o_ref):                        # (TB, OUT)  f32
    x = x_ref[...]

    # fc_s + ReLU  (bf16 operands, f32 accumulation)
    h = jnp.dot(x, ws_ref[...], preferred_element_type=jnp.float32) + bs_ref[...]
    h = jnp.maximum(h, 0.0)

    # fc2 + ReLU
    h = jnp.dot(h.astype(w2_ref.dtype), w2_ref[...],
                preferred_element_type=jnp.float32) + b2_ref[...]
    h = jnp.maximum(h, 0.0)

    # ---- Dropout(p=0.2), training mode --------------------------------------
    # Counter-based hash PRNG (murmur3 finalizer) over a per-element counter
    # that mixes in the batch-tile index, so tiles draw independent masks.
    # Integer threshold test; rescale 1/(1-p) is already folded into w3.
    tb, u = h.shape
    row = jax.lax.broadcasted_iota(jnp.uint32, (tb, u), 0)
    col = jax.lax.broadcasted_iota(jnp.uint32, (tb, u), 1)
    tile = pl.program_id(0).astype(jnp.uint32)
    ctr = (tile * jnp.uint32(tb) + row) * jnp.uint32(u) + col
    bits = ctr ^ seed_ref[0].astype(jnp.uint32)
    bits = bits * jnp.uint32(0x9E3779B1)
    bits = bits ^ (bits >> jnp.uint32(16))
    bits = bits * jnp.uint32(0x85EBCA6B)
    bits = bits ^ (bits >> jnp.uint32(13))
    bits = bits * jnp.uint32(0xC2B2AE35)
    bits = bits ^ (bits >> jnp.uint32(16))
    r24 = (bits >> jnp.uint32(8)).astype(jnp.int32)        # top 24 bits, signed-safe
    keep = r24 >= jnp.int32(_KEEP_THRESHOLD)
    h = jnp.where(keep, h, 0.0)
    # --------------------------------------------------------------------------

    # fc3 + ReLU  (w3 carries the 1/(1-p) dropout rescale)
    h = jnp.dot(h.astype(w3_ref.dtype), w3_ref[...],
                preferred_element_type=jnp.float32) + b3_ref[...]
    h = jnp.maximum(h, 0.0)

    # fc_e (no activation)
    o_ref[...] = (jnp.dot(h.astype(we_ref.dtype), we_ref[...],
                          preferred_element_type=jnp.float32)
                  + be_ref[...]).astype(o_ref.dtype)


def net_forward(x, params, seed, *, compute_dtype=jnp.bfloat16, batch_tile=None):
    """x: (B, input_size) f32. params: dict of pre-transposed weights/biases."""
    x = jnp.asarray(x)
    B, IN = x.shape
    U = params["ws"].shape[1]
    OUT = params["we"].shape[1]
    dsz = jnp.dtype(compute_dtype).itemsize

    # MXU operands in bf16; biases stay f32 (added onto the f32 accumulator).
    xc = x.astype(compute_dtype)
    ws = params["ws"].astype(compute_dtype)
    w2 = params["w2"].astype(compute_dtype)
    # Fold the dropout 1/(1-p) rescale into w3 (one-time weight scale).
    w3 = (params["w3"] * (1.0 / (1.0 - DROPOUT_P))).astype(compute_dtype)
    we = params["we"].astype(compute_dtype)
    bs, b2, b3, be = params["bs"], params["b2"], params["b3"], params["be"]

    # Batch tile: large enough to amortize per-grid-step overhead, small enough
    # that weights + double-buffered tiles fit comfortably in VMEM on every
    # generation (v7x: 64 MiB physical / 32 MiB default scoped).
    if batch_tile is None:
        batch_tile = 512
    TB = max(8, _round_up(min(batch_tile, _round_up(B, 8)), 8))
    weight_bytes = (IN * U + 2 * U * U + U * OUT) * dsz + (3 * U + OUT) * 4

    def tile_bytes(tb):
        # double-buffered x in / o out + headroom for f32 intermediates
        return 2 * tb * (IN * dsz + OUT * 4) + 4 * tb * U * 4

    while TB > 8 and weight_bytes + tile_bytes(TB) > 24 * 1024 * 1024:
        TB //= 2
        TB = _round_up(TB, 8)

    Bp = _round_up(B, TB)
    if Bp != B:
        xc = jnp.pad(xc, ((0, Bp - B), (0, 0)))

    vmem_limit = int(min(64 * 1024 * 1024,
                         max(16 * 1024 * 1024,
                             2 * (weight_bytes + tile_bytes(TB)))))

    seed_arr = jnp.asarray([seed], dtype=jnp.int32)
    grid = (Bp // TB,)

    # Scalar-prefetched seed lands in SMEM; index_maps receive it as a trailing arg.
    grid_spec = pltpu.PrefetchScalarGridSpec(
        num_scalar_prefetch=1,
        grid=grid,
        in_specs=[
            pl.BlockSpec((TB, IN), lambda i, s: (i, 0)),     # x: streamed per tile
            pl.BlockSpec((IN, U),  lambda i, s: (0, 0)),     # weights/biases: VMEM-resident
            pl.BlockSpec((1, U),   lambda i, s: (0, 0)),
            pl.BlockSpec((U, U),   lambda i, s: (0, 0)),
            pl.BlockSpec((1, U),   lambda i, s: (0, 0)),
            pl.BlockSpec((U, U),   lambda i, s: (0, 0)),
            pl.BlockSpec((1, U),   lambda i, s: (0, 0)),
            pl.BlockSpec((U, OUT), lambda i, s: (0, 0)),
            pl.BlockSpec((1, OUT), lambda i, s: (0, 0)),
        ],
        out_specs=pl.BlockSpec((TB, OUT), lambda i, s: (i, 0)),
    )

    out = pl.pallas_call(
        mlp_kernel,
        out_shape=jax.ShapeDtypeStruct((Bp, OUT), jnp.float32),
        grid_spec=grid_spec,
        compiler_params=pltpu.CompilerParams(
            dimension_semantics=("parallel",),   # shards batch tiles across v7x's 2 TCs
            vmem_limit_bytes=vmem_limit,
        ),
    )(seed_arr, xc, ws, bs, w2, b2, w3, b3, we, be)

    return out[:B] if Bp != B else out


def init_params(key, input_size, output_size, unit_size):
    """Deterministic init mimicking nn.Linear: U(-1/sqrt(fan_in), 1/sqrt(fan_in)).
    Weights are stored transposed: (in_features, out_features); biases (1, out)."""
    def linear(k, fan_in, fan_out):
        kw, kb = jax.random.split(k)
        bound = 1.0 / jnp.sqrt(jnp.float32(fan_in))
        w = jax.random.uniform(kw, (fan_in, fan_out), jnp.float32, -bound, bound)
        b = jax.random.uniform(kb, (1, fan_out), jnp.float32, -bound, bound)
        return w, b

    k1, k2, k3, k4 = jax.random.split(key, 4)
    ws, bs = linear(k1, input_size, unit_size)
    w2, b2 = linear(k2, unit_size, unit_size)
    w3, b3 = linear(k3, unit_size, unit_size)
    we, be = linear(k4, unit_size, output_size)
    return {"ws": ws, "bs": bs, "w2": w2, "b2": b2,
            "w3": w3, "b3": b3, "we": we, "be": be}


if __name__ == "__main__":
    input_size, unit_size, output_size = 32, 64, 16
    batch = 8

    key = jax.random.PRNGKey(0)
    kx, kp = jax.random.split(key)
    x = jax.random.normal(kx, (batch, input_size), dtype=jnp.float32)
    params = init_params(kp, input_size, output_size, unit_size)

    out = net_forward(x, params, seed=0)
    out = jax.block_until_ready(out)

    assert out.shape == (batch, output_size), out.shape
    assert bool(jnp.all(jnp.isfinite(out)))
    print("KERNEL_OK")
</pallas_src>

<mosaic_0001>
module attributes {stable_mosaic.version = 11 : i64} {
  func.func @mlp_kernel(%arg0: i32, %arg1: memref<1xi32, #tpu.memory_space<smem>>, %arg2: memref<8x32xbf16, #tpu.memory_space<vmem>>, %arg3: memref<32x64xbf16, #tpu.memory_space<vmem>>, %arg4: memref<1x64xf32, #tpu.memory_space<vmem>>, %arg5: memref<64x64xbf16, #tpu.memory_space<vmem>>, %arg6: memref<1x64xf32, #tpu.memory_space<vmem>>, %arg7: memref<64x64xbf16, #tpu.memory_space<vmem>>, %arg8: memref<1x64xf32, #tpu.memory_space<vmem>>, %arg9: memref<64x16xbf16, #tpu.memory_space<vmem>>, %arg10: memref<1x16xf32, #tpu.memory_space<vmem>>, %arg11: memref<8x16xf32, #tpu.memory_space<vmem>>) attributes {dimension_semantics = [#tpu.dimension_semantics<parallel>], iteration_bounds = array<i64: 1>, scalar_prefetch = 1 : i64, scratch_operands = 0 : i64, tpu.core_type = #tpu.core_type<tc>, window_params = [{transform_indices = @transform_0, window_bounds = array<i64: 8, 32>}, {pipeline_mode = #tpu.pipeline_mode<synchronous>, transform_indices = @transform_1, window_bounds = array<i64: 32, 64>}, {pipeline_mode = #tpu.pipeline_mode<synchronous>, transform_indices = @transform_2, window_bounds = array<i64: 1, 64>}, {pipeline_mode = #tpu.pipeline_mode<synchronous>, transform_indices = @transform_3, window_bounds = array<i64: 64, 64>}, {pipeline_mode = #tpu.pipeline_mode<synchronous>, transform_indices = @transform_4, window_bounds = array<i64: 1, 64>}, {pipeline_mode = #tpu.pipeline_mode<synchronous>, transform_indices = @transform_5, window_bounds = array<i64: 64, 64>}, {pipeline_mode = #tpu.pipeline_mode<synchronous>, transform_indices = @transform_6, window_bounds = array<i64: 1, 64>}, {pipeline_mode = #tpu.pipeline_mode<synchronous>, transform_indices = @transform_7, window_bounds = array<i64: 64, 16>}, {pipeline_mode = #tpu.pipeline_mode<synchronous>, transform_indices = @transform_8, window_bounds = array<i64: 1, 16>}, {transform_indices = @transform_9, window_bounds = array<i64: 8, 16>}]} {
    %c0 = arith.constant 0 : index
    %c0_0 = arith.constant 0 : index
    %0 = vector.load %arg2[%c0, %c0_0] : memref<8x32xbf16, #tpu.memory_space<vmem>>, vector<8x32xbf16>
    %c0_1 = arith.constant 0 : index
    %c0_2 = arith.constant 0 : index
    %1 = vector.load %arg3[%c0_1, %c0_2] : memref<32x64xbf16, #tpu.memory_space<vmem>>, vector<32x64xbf16>
    %cst = arith.constant dense<0.000000e+00> : vector<8x64xf32>
    %2 = tpu.matmul %0, %1, %cst {dimension_numbers = #tpu.dot_dimension_numbers<[1], [0], [0], [1], [0, 0, 1, 1], [], []>} : vector<8x32xbf16>, vector<32x64xbf16>, vector<8x64xf32> -> vector<8x64xf32>
    %c0_3 = arith.constant 0 : index
    %c0_4 = arith.constant 0 : index
    %3 = vector.load %arg4[%c0_3, %c0_4] : memref<1x64xf32, #tpu.memory_space<vmem>>, vector<1x64xf32>
    %4 = vector.broadcast %3 : vector<1x64xf32> to vector<8x64xf32>
    %5 = arith.addf %2, %4 : vector<8x64xf32>
    %cst_5 = arith.constant 0.000000e+00 : f32
    %6 = vector.broadcast %cst_5 : f32 to vector<8x64xf32>
    %7 = arith.maximumf %5, %6 : vector<8x64xf32>
    %8 = arith.truncf %7 : vector<8x64xf32> to vector<8x64xbf16>
    %c0_6 = arith.constant 0 : index
    %c0_7 = arith.constant 0 : index
    %9 = vector.load %arg5[%c0_6, %c0_7] : memref<64x64xbf16, #tpu.memory_space<vmem>>, vector<64x64xbf16>
    %cst_8 = arith.constant dense<0.000000e+00> : vector<8x64xf32>
    %10 = tpu.matmul %8, %9, %cst_8 {dimension_numbers = #tpu.dot_dimension_numbers<[1], [0], [0], [1], [0, 0, 1, 1], [], []>} : vector<8x64xbf16>, vector<64x64xbf16>, vector<8x64xf32> -> vector<8x64xf32>
    %c0_9 = arith.constant 0 : index
    %c0_10 = arith.constant 0 : index
    %11 = vector.load %arg6[%c0_9, %c0_10] : memref<1x64xf32, #tpu.memory_space<vmem>>, vector<1x64xf32>
    %12 = vector.broadcast %11 : vector<1x64xf32> to vector<8x64xf32>
    %13 = arith.addf %10, %12 : vector<8x64xf32>
    %cst_11 = arith.constant 0.000000e+00 : f32
    %14 = vector.broadcast %cst_11 : f32 to vector<8x64xf32>
    %15 = arith.maximumf %13, %14 : vector<8x64xf32>
    %16 = tpu.iota {dimensions = array<i32: 0>} : vector<8x64xi32>
    %17 = tpu.iota {dimensions = array<i32: 1>} : vector<8x64xi32>
    %c8_i32 = arith.constant 8 : i32
    %18 = arith.muli %arg0, %c8_i32 : i32
    %19 = vector.broadcast %18 : i32 to vector<8x64xi32>
    %20 = arith.addi %19, %16 : vector<8x64xi32>
    %c64_i32 = arith.constant 64 : i32
    %21 = vector.broadcast %c64_i32 : i32 to vector<8x64xi32>
    %22 = arith.muli %20, %21 : vector<8x64xi32>
    %23 = arith.addi %22, %17 : vector<8x64xi32>
    %c0_12 = arith.constant 0 : index
    %24 = memref.load %arg1[%c0_12] : memref<1xi32, #tpu.memory_space<smem>>
    %25 = vector.broadcast %24 : i32 to vector<8x64xi32>
    %26 = arith.xori %23, %25 : vector<8x64xi32>
    %c-1640531535_i32 = arith.constant -1640531535 : i32
    %27 = vector.broadcast %c-1640531535_i32 : i32 to vector<8x64xi32>
    %28 = arith.muli %26, %27 : vector<8x64xi32>
    %c16_i32 = arith.constant 16 : i32
    %29 = vector.broadcast %c16_i32 : i32 to vector<8x64xi32>
    %30 = arith.shrui %28, %29 : vector<8x64xi32>
    %31 = arith.xori %28, %30 : vector<8x64xi32>
    %c-2048144789_i32 = arith.constant -2048144789 : i32
    %32 = vector.broadcast %c-2048144789_i32 : i32 to vector<8x64xi32>
    %33 = arith.muli %31, %32 : vector<8x64xi32>
    %c13_i32 = arith.constant 13 : i32
    %34 = vector.broadcast %c13_i32 : i32 to vector<8x64xi32>
    %35 = arith.shrui %33, %34 : vector<8x64xi32>
    %36 = arith.xori %33, %35 : vector<8x64xi32>
    %c-1028477387_i32 = arith.constant -1028477387 : i32
    %37 = vector.broadcast %c-1028477387_i32 : i32 to vector<8x64xi32>
    %38 = arith.muli %36, %37 : vector<8x64xi32>
    %c16_i32_13 = arith.constant 16 : i32
    %39 = vector.broadcast %c16_i32_13 : i32 to vector<8x64xi32>
    %40 = arith.shrui %38, %39 : vector<8x64xi32>
    %41 = arith.xori %38, %40 : vector<8x64xi32>
    %c8_i32_14 = arith.constant 8 : i32
    %42 = vector.broadcast %c8_i32_14 : i32 to vector<8x64xi32>
    %43 = arith.shrui %41, %42 : vector<8x64xi32>
    %c3355443_i32 = arith.constant 3355443 : i32
    %44 = vector.broadcast %c3355443_i32 : i32 to vector<8x64xi32>
    %45 = arith.cmpi sge, %43, %44 : vector<8x64xi32>
    %cst_15 = arith.constant 0.000000e+00 : f32
    %46 = vector.broadcast %cst_15 : f32 to vector<8x64xf32>
    %47 = arith.select %45, %15, %46 : vector<8x64xi1>, vector<8x64xf32>
    %48 = arith.truncf %47 : vector<8x64xf32> to vector<8x64xbf16>
    %c0_16 = arith.constant 0 : index
    %c0_17 = arith.constant 0 : index
    %49 = vector.load %arg7[%c0_16, %c0_17] : memref<64x64xbf16, #tpu.memory_space<vmem>>, vector<64x64xbf16>
    %cst_18 = arith.constant dense<0.000000e+00> : vector<8x64xf32>
    %50 = tpu.matmul %48, %49, %cst_18 {dimension_numbers = #tpu.dot_dimension_numbers<[1], [0], [0], [1], [0, 0, 1, 1], [], []>} : vector<8x64xbf16>, vector<64x64xbf16>, vector<8x64xf32> -> vector<8x64xf32>
    %c0_19 = arith.constant 0 : index
    %c0_20 = arith.constant 0 : index
    %51 = vector.load %arg8[%c0_19, %c0_20] : memref<1x64xf32, #tpu.memory_space<vmem>>, vector<1x64xf32>
    %52 = vector.broadcast %51 : vector<1x64xf32> to vector<8x64xf32>
    %53 = arith.addf %50, %52 : vector<8x64xf32>
    %cst_21 = arith.constant 0.000000e+00 : f32
    %54 = vector.broadcast %cst_21 : f32 to vector<8x64xf32>
    %55 = arith.maximumf %53, %54 : vector<8x64xf32>
    %56 = arith.truncf %55 : vector<8x64xf32> to vector<8x64xbf16>
    %c0_22 = arith.constant 0 : index
    %c0_23 = arith.constant 0 : index
    %57 = vector.load %arg9[%c0_22, %c0_23] : memref<64x16xbf16, #tpu.memory_space<vmem>>, vector<64x16xbf16>
    %cst_24 = arith.constant dense<0.000000e+00> : vector<8x16xf32>
    %58 = tpu.matmul %56, %57, %cst_24 {dimension_numbers = #tpu.dot_dimension_numbers<[1], [0], [0], [1], [0, 0, 1, 1], [], []>} : vector<8x64xbf16>, vector<64x16xbf16>, vector<8x16xf32> -> vector<8x16xf32>
    %c0_25 = arith.constant 0 : index
    %c0_26 = arith.constant 0 : index
    %59 = vector.load %arg10[%c0_25, %c0_26] : memref<1x16xf32, #tpu.memory_space<vmem>>, vector<1x16xf32>
    %60 = vector.broadcast %59 : vector<1x16xf32> to vector<8x16xf32>
    %61 = arith.addf %58, %60 : vector<8x16xf32>
    %c0_27 = arith.constant 0 : index
    %c0_28 = arith.constant 0 : index
    %62 = vector.load %arg11[%c0_27, %c0_28] : memref<8x16xf32, #tpu.memory_space<vmem>>, vector<8x16xf32>
    tpu.vector_store %arg11[%c0_27, %c0_28], %61 {strides = array<i32>} : memref<8x16xf32, #tpu.memory_space<vmem>>, vector<8x16xf32>,
    return
  }
  func.func @transform_0(%arg0: i32, %arg1: memref<1xi32, #tpu.memory_space<smem>>) -> (i32, i32) {
    %c0_i32 = arith.constant 0 : i32
    %c0_i32_0 = arith.constant 0 : i32
    return %arg0, %c0_i32 : i32, i32
  }
  func.func @transform_1(%arg0: i32, %arg1: memref<1xi32, #tpu.memory_space<smem>>) -> (i32, i32) {
    %c0_i32 = arith.constant 0 : i32
    %c0_i32_0 = arith.constant 0 : i32
    %c0_i32_1 = arith.constant 0 : i32
    return %c0_i32, %c0_i32_0 : i32, i32
  }
  func.func @transform_2(%arg0: i32, %arg1: memref<1xi32, #tpu.memory_space<smem>>) -> (i32, i32) {
    %c0_i32 = arith.constant 0 : i32
    %c0_i32_0 = arith.constant 0 : i32
    %c0_i32_1 = arith.constant 0 : i32
    return %c0_i32, %c0_i32_0 : i32, i32
  }
  func.func @transform_3(%arg0: i32, %arg1: memref<1xi32, #tpu.memory_space<smem>>) -> (i32, i32) {
    %c0_i32 = arith.constant 0 : i32
    %c0_i32_0 = arith.constant 0 : i32
    %c0_i32_1 = arith.constant 0 : i32
    return %c0_i32, %c0_i32_0 : i32, i32
  }
  func.func @transform_4(%arg0: i32, %arg1: memref<1xi32, #tpu.memory_space<smem>>) -> (i32, i32) {
    %c0_i32 = arith.constant 0 : i32
    %c0_i32_0 = arith.constant 0 : i32
    %c0_i32_1 = arith.constant 0 : i32
    return %c0_i32, %c0_i32_0 : i32, i32
  }
  func.func @transform_5(%arg0: i32, %arg1: memref<1xi32, #tpu.memory_space<smem>>) -> (i32, i32) {
    %c0_i32 = arith.constant 0 : i32
    %c0_i32_0 = arith.constant 0 : i32
    %c0_i32_1 = arith.constant 0 : i32
    return %c0_i32, %c0_i32_0 : i32, i32
  }
  func.func @transform_6(%arg0: i32, %arg1: memref<1xi32, #tpu.memory_space<smem>>) -> (i32, i32) {
    %c0_i32 = arith.constant 0 : i32
    %c0_i32_0 = arith.constant 0 : i32
    %c0_i32_1 = arith.constant 0 : i32
    return %c0_i32, %c0_i32_0 : i32, i32
  }
  func.func @transform_7(%arg0: i32, %arg1: memref<1xi32, #tpu.memory_space<smem>>) -> (i32, i32) {
    %c0_i32 = arith.constant 0 : i32
    %c0_i32_0 = arith.constant 0 : i32
    %c0_i32_1 = arith.constant 0 : i32
    return %c0_i32, %c0_i32_0 : i32, i32
  }
  func.func @transform_8(%arg0: i32, %arg1: memref<1xi32, #tpu.memory_space<smem>>) -> (i32, i32) {
    %c0_i32 = arith.constant 0 : i32
    %c0_i32_0 = arith.constant 0 : i32
    %c0_i32_1 = arith.constant 0 : i32
    return %c0_i32, %c0_i32_0 : i32, i32
  }
  func.func @transform_9(%arg0: i32, %arg1: memref<1xi32, #tpu.memory_space<smem>>) -> (i32, i32) {
    %c0_i32 = arith.constant 0 : i32
    %c0_i32_0 = arith.constant 0 : i32
    return %arg0, %c0_i32 : i32, i32
  }
}

</mosaic_0001>

<llo_original>
// kernel: tpu_custom_call.1
$region0: #{tpu_custom_call.1}
  #allocation0 [shape = 'u32[]', space=smem, size = 0x4, offset = 0x4, fixed_abs, tag = 'smem constant byte address 0x4 - core index']
  #allocation1 [shape = 'u32[144,128]{1,0:T(1,128)}', space=vmem, size = 0x12000, scoped, tag = 'internal scratch']
  #allocation2 [shape = 's32[1]{0}', space=sflag, size = 0x4, scoped, tag = 'scoped memory for tpu_custom_call.1']
  #allocation3 [shape = 's32[1]{0:T(128)S(6)}', space=smem, size = 0x200, scoped, tag = 'prefetched SMEM operand 0']
  %s0 = inlined_call_operand.<no memory space> [shape: s32[1], index: 0, kind: input, shape index: {}]
  %s1 = inlined_call_operand.hbm [shape: bf16[8,32], index: 1, kind: input, shape index: {}]
  %s2 = inlined_call_operand.vmem [shape: bf16[32,64], index: 2, kind: input, shape index: {}]
  %s3 = inlined_call_operand.vmem [shape: f32[1,64], index: 3, kind: input, shape index: {}]
  %s4 = inlined_call_operand.vmem [shape: bf16[64,64], index: 4, kind: input, shape index: {}]
  %s5 = inlined_call_operand.vmem [shape: f32[1,64], index: 5, kind: input, shape index: {}]
  %s6 = inlined_call_operand.hbm [shape: bf16[64,64], index: 6, kind: input, shape index: {}]
  %s7 = inlined_call_operand.vmem [shape: f32[1,64], index: 7, kind: input, shape index: {}]
  %s8 = inlined_call_operand.vmem [shape: bf16[64,16], index: 8, kind: input, shape index: {}]
  %s9 = inlined_call_operand.vmem [shape: f32[1,16], index: 9, kind: input, shape index: {}]
  %s10 = inlined_call_operand.hbm [shape: f32[8,16], index: 10, kind: output, shape index: {}]
  %s11 = sld [smem:[#allocation0]]
  $region54: #{tpu_custom_call.1} parent=0
    _
  %s13 = ssub.s32 1, %s11
  %s14 = scalar_select 0, %s13, %s11
  %15 = sst [smem:[#allocation3]] %s0
  $region1: #{tpu_custom_call.1} parent=0
    #allocation4 [shape = 'u8[2048]{0}', space=vmem, size = 0x800, scoped, tag = 'input window, operand 1, single buffered']
    #allocation5 [shape = 's32[1]{0}', space=sflag, size = 0x4, scoped, tag = 'scoped memory for tpu_custom_call.1']
    #allocation6 [shape = 's32[1]{0}', space=sflag, size = 0x4, scoped, tag = 'scoped memory for tpu_custom_call.1']
    #allocation7 [shape = 'u8[16384]{0}', space=vmem, size = 0x4000, scoped, tag = 'input window, operand 6, single buffered']
    #allocation8 [shape = 's32[1]{0}', space=sflag, size = 0x4, scoped, tag = 'scoped memory for tpu_custom_call.1']
    #allocation9 [shape = 'u8[4096]{0}', space=vmem, size = 0x1000, scoped, tag = 'output window, operand 0, single buffered']
    %16 = vsyncpa [#allocation5], 0
    %17 = vsyncpa [#allocation8], 0
    %18 = vsyncpa [#allocation6], 0
    // Predicated region
    $region2: #{tpu_custom_call.1} parent=1 // pred_check
      _
    $region3: #{tpu_custom_call.1} parent=1 // pred_check_branch
      %20 = sbr.rel (0) target = $region5
    $region4: #{tpu_custom_call.1} parent=1 // pred_region
      %s22 = ssub.s32 64, 64
      %23 = vsyncadd [#allocation5], %s22
      %s25 = sshll.u32 [#allocation4], 4
      %s26 = int_to_ptr.vmem [resolvable:$true] %s25
      %28 = dma.hbm_to_vmem [thread:$0]  %s1, 64, %s26, [#allocation5]
    $region5: #{tpu_custom_call.1} parent=1 // pred_fallthru
      _
    // Predicated region
    $region6: #{tpu_custom_call.1} parent=1 // pred_check
      _
    $region7: #{tpu_custom_call.1} parent=1 // pred_check_branch
      %30 = sbr.rel (0) target = $region9
    $region8: #{tpu_custom_call.1} parent=1 // pred_region
      _
    $region9: #{tpu_custom_call.1} parent=1 // pred_fallthru
      _
    // Predicated region
    $region10: #{tpu_custom_call.1} parent=1 // pred_check
      _
    $region11: #{tpu_custom_call.1} parent=1 // pred_check_branch
      %32 = sbr.rel (0) target = $region13
    $region12: #{tpu_custom_call.1} parent=1 // pred_region
      _
    $region13: #{tpu_custom_call.1} parent=1 // pred_fallthru
      _
    // Predicated region
    $region14: #{tpu_custom_call.1} parent=1 // pred_check
      _
    $region15: #{tpu_custom_call.1} parent=1 // pred_check_branch
      %34 = sbr.rel (0) target = $region17
    $region16: #{tpu_custom_call.1} parent=1 // pred_region
      _
    $region17: #{tpu_custom_call.1} parent=1 // pred_fallthru
      _
    // Predicated region
    $region18: #{tpu_custom_call.1} parent=1 // pred_check
      _
    $region19: #{tpu_custom_call.1} parent=1 // pred_check_branch
      %36 = sbr.rel (0) target = $region21
    $region20: #{tpu_custom_call.1} parent=1 // pred_region
      _
    $region21: #{tpu_custom_call.1} parent=1 // pred_fallthru
      _
    // Predicated region
    $region22: #{tpu_custom_call.1} parent=1 // pred_check
      _
    $region23: #{tpu_custom_call.1} parent=1 // pred_check_branch
      %38 = sbr.rel (0) target = $region25
    $region24: #{tpu_custom_call.1} parent=1 // pred_region
      %s40 = ssub.s32 512, 512
      %41 = vsyncadd [#allocation8], %s40
      %s42 = sshll.u32 [#allocation7], 4
      %s43 = int_to_ptr.vmem [resolvable:$true] %s42
      %48 = dma.hbm_to_vmem [thread:$0]  %s6, 512, %s43, [#allocation8], 64, 64, 4
    $region25: #{tpu_custom_call.1} parent=1 // pred_fallthru
      _
    // Predicated region
    $region26: #{tpu_custom_call.1} parent=1 // pred_check
      _
    $region27: #{tpu_custom_call.1} parent=1 // pred_check_branch
      %50 = sbr.rel (0) target = $region29
    $region28: #{tpu_custom_call.1} parent=1 // pred_region
      _
    $region29: #{tpu_custom_call.1} parent=1 // pred_fallthru
      _
    // Predicated region
    $region30: #{tpu_custom_call.1} parent=1 // pred_check
      _
    $region31: #{tpu_custom_call.1} parent=1 // pred_check_branch
      %52 = sbr.rel (0) target = $region33
    $region32: #{tpu_custom_call.1} parent=1 // pred_region
      _
    $region33: #{tpu_custom_call.1} parent=1 // pred_fallthru
      _
    // Predicated region
    $region34: #{tpu_custom_call.1} parent=1 // pred_check
      _
    $region35: #{tpu_custom_call.1} parent=1 // pred_check_branch
      %54 = sbr.rel (0) target = $region37
    $region36: #{tpu_custom_call.1} parent=1 // pred_region
      _
    $region37: #{tpu_custom_call.1} parent=1 // pred_fallthru
      _
    // Predicated region
    $region38: #{tpu_custom_call.1} parent=1 // pred_check
      _
    $region39: #{tpu_custom_call.1} parent=1 // pred_check_branch
      %56 = sbr.rel (0) target = $region41
    $region40: #{tpu_custom_call.1} parent=1 // pred_region
      %57 = dma.done [#allocation5], 64
    $region41: #{tpu_custom_call.1} parent=1 // pred_fallthru
      _
    // Predicated region
    $region42: #{tpu_custom_call.1} parent=1 // pred_check
      _
    $region43: #{tpu_custom_call.1} parent=1 // pred_check_branch
      %59 = sbr.rel (0) target = $region45
    $region44: #{tpu_custom_call.1} parent=1 // pred_region
      %60 = dma.done [#allocation8], 512
    $region45: #{tpu_custom_call.1} parent=1 // pred_fallthru
      _
    %v62 = vld [vmem:[#allocation4] sm:$0xf]
    %v63 = vld [vmem:[%s2] sm:$0xf]
    %v64 = vld [vmem:[%s2 + $0x4] sm:$0xf]
    %v65 = vld [vmem:[%s2 + $0x8] sm:$0xf]
    %v66 = vld [vmem:[%s2 + $0xc] sm:$0xf]
    %v67 = vld [vmem:[%s3] sm:$0x1]
    %v69 = vlaneseq
    %v70 = vshrl.u32 %v69, 7
    %v71 = vsub.s32 0, %v70
    %v72 = vrot.slane %v67, %v71
    %v78 = vunpack.c.l.b16 %v63
    %v79 = vunpack.c.l.b16 %v64
    %v80 = vunpack.c.l.b16 %v65
    %v81 = vunpack.c.l.b16 %v66
    %v82 = vpack.c.b16 %v79, %v78
    %v83 = vpack.c.b16 %v81, %v80
    %vm86 = vcmask 261120
    %v88 = vsel %vm86, %v62, 0
    %90 = vmatprep.subr.bf16.mxu0 0
    %91 = vmatpush1.bf16.msra.mxu0 %v82
    %92 = vmatprep.subr.bf16.mxu0 0
    %93 = vmatpush1.bf16.msra.mxu0 %v83
    %94 = vmatprep.subr.bf16.mxu0 0
    %95 = vmatpush1.bf16.msra.mxu0 0
    %96 = vmatprep.subr.bf16.mxu0 0
    %97 = vmatpush1.bf16.msra.mxu0 0
    %98 = vmatprep.subr.bf16.mxu0 0
    %99 = vmatpush1.bf16.msra.mxu0 0
    %100 = vmatprep.subr.bf16.mxu0 0
    %101 = vmatpush1.bf16.msra.mxu0 0
    %102 = vmatprep.subr.bf16.mxu0 0
    %103 = vmatpush1.bf16.msra.mxu0 0
    %104 = vmatprep.subr.bf16.mxu0 0
    %105 = vmatpush1.bf16.msra.mxu0 0
    %106 = vmatprep.subr.bf16.mxu0 0
    %107 = vmatpush1.bf16.msra.mxu0 0
    %108 = vmatprep.subr.bf16.mxu0 0
    %109 = vmatpush1.bf16.msra.mxu0 0
    %110 = vmatprep.subr.bf16.mxu0 0
    %111 = vmatpush1.bf16.msra.mxu0 0
    %112 = vmatprep.subr.bf16.mxu0 0
    %113 = vmatpush1.bf16.msra.mxu0 0
    %114 = vmatprep.subr.bf16.mxu0 0
    %115 = vmatpush1.bf16.msra.mxu0 0
    %116 = vmatprep.subr.bf16.mxu0 0
    %117 = vmatpush1.bf16.msra.mxu0 0
    %118 = vmatprep.subr.bf16.mxu0 0
    %119 = vmatpush1.bf16.msra.mxu0 0
    %120 = vmatprep.subr.bf16.mxu0 0
    %121 = vmatpush1.bf16.msra.mxu0 0
    %122 = vmatprep.mubr.bf16.mxu0 0
    %123 = vmatmul.mubr.bf16.gmra.mrb[0].mxu0 %v88
    %v124 = vpop.f32.mrb[0].mxu0
    %v125 = vadd.f32 %v72, %v124
    %v126 = vpop.f32.mrb[0].mxu0
    %v127 = vpop.f32.mrb[0].mxu0
    %v128 = vpop.f32.mrb[0].mxu0
    %129 = vdwg.mxu0
    %v130 = vmax.f32 %v125, 0.0
    %v131 = vpack.c.bf16 %v130, %v130
    %v132 = vld [vmem:[%s4] sm:$0xf]
    %v133 = vld [vmem:[%s4 + $0x4] sm:$0xf]
    %v134 = vld [vmem:[%s4 + $0x8] sm:$0xf]
    %v135 = vld [vmem:[%s4 + $0xc] sm:$0xf]
    %v136 = vld [vmem:[%s4 + $0x10] sm:$0xf]
    %v137 = vld [vmem:[%s4 + $0x14] sm:$0xf]
    %v138 = vld [vmem:[%s4 + $0x18] sm:$0xf]
    %v139 = vld [vmem:[%s4 + $0x1c] sm:$0xf]
    %v140 = vld [vmem:[%s5] sm:$0x1]
    %v142 = vlaneseq
    %v143 = vshrl.u32 %v142, 7
    %v144 = vsub.s32 0, %v143
    %v145 = vrot.slane %v140, %v144
    %v155 = vunpack.c.l.b16 %v132
    %v156 = vunpack.c.l.b16 %v133
    %v157 = vunpack.c.l.b16 %v134
    %v158 = vunpack.c.l.b16 %v135
    %v159 = vunpack.c.l.b16 %v136
    %v160 = vunpack.c.l.b16 %v137
    %v161 = vunpack.c.l.b16 %v138
    %v162 = vunpack.c.l.b16 %v139
    %v163 = vpack.c.b16 %v156, %v155
    %v164 = vpack.c.b16 %v158, %v157
    %v165 = vpack.c.b16 %v160, %v159
    %v166 = vpack.c.b16 %v162, %v161
    %vm171 = vcmask 523264
    %v173 = vsel %vm171, %v131, 0
    %175 = vmatprep.subr.bf16.mxu0 0
    %176 = vmatpush1.bf16.msra.mxu0 %v163
    %177 = vmatprep.subr.bf16.mxu0 0
    %178 = vmatpush1.bf16.msra.mxu0 %v164
    %179 = vmatprep.subr.bf16.mxu0 0
    %180 = vmatpush1.bf16.msra.mxu0 %v165
    %181 = vmatprep.subr.bf16.mxu0 0
    %182 = vmatpush1.bf16.msra.mxu0 %v166
    %183 = vmatprep.subr.bf16.mxu0 0
    %184 = vmatpush1.bf16.msra.mxu0 0
    %185 = vmatprep.subr.bf16.mxu0 0
    %186 = vmatpush1.bf16.msra.mxu0 0
    %187 = vmatprep.subr.bf16.mxu0 0
    %188 = vmatpush1.bf16.msra.mxu0 0
    %189 = vmatprep.subr.bf16.mxu0 0
    %190 = vmatpush1.bf16.msra.mxu0 0
    %191 = vmatprep.subr.bf16.mxu0 0
    %192 = vmatpush1.bf16.msra.mxu0 0
    %193 = vmatprep.subr.bf16.mxu0 0
    %194 = vmatpush1.bf16.msra.mxu0 0
    %195 = vmatprep.subr.bf16.mxu0 0
    %196 = vmatpush1.bf16.msra.mxu0 0
    %197 = vmatprep.subr.bf16.mxu0 0
    %198 = vmatpush1.bf16.msra.mxu0 0
    %199 = vmatprep.subr.bf16.mxu0 0
    %200 = vmatpush1.bf16.msra.mxu0 0
    %201 = vmatprep.subr.bf16.mxu0 0
    %202 = vmatpush1.bf16.msra.mxu0 0
    %203 = vmatprep.subr.bf16.mxu0 0
    %204 = vmatpush1.bf16.msra.mxu0 0
    %205 = vmatprep.subr.bf16.mxu0 0
    %206 = vmatpush1.bf16.msra.mxu0 0
    %207 = vmatprep.mubr.bf16.mxu0 0
    %208 = vmatmul.mubr.bf16.gmra.mrb[0].mxu0 %v173
    %v209 = vpop.f32.mrb[0].mxu0
    %v210 = vadd.f32 %v145, %v209
    %v211 = vpop.f32.mrb[0].mxu0
    %v212 = vpop.f32.mrb[0].mxu0
    %v213 = vpop.f32.mrb[0].mxu0
    %214 = vdwg.mxu0
    %v215 = vmax.f32 %v210, 0.0
    %v216 = vlaneseq
    %v217 = vshrl.u32 %v216, 7
    %v218 = vlaneseq
    %v219 = vand.u32 %v218, 127
    %s220 = smul.u32 0, 8
    %v221 = vstv %s220
    %v222 = vadd.s32 %v221, %v217
    %v223 = vmul.u32 %v222, 64
    %v224 = vadd.s32 %v223, %v219
    %s225 = sld [smem:[#allocation3]]
    %v226 = vstv %s225
    %v227 = vxor.u32 %v224, %v226
    %v228 = vmul.u32 %v227, 2654435761
    %v229 = vshrl.u32 %v228, 16
    %v230 = vxor.u32 %v228, %v229
    %v231 = vmul.u32 %v230, 2246822507
    %v232 = vshrl.u32 %v231, 13
    %v233 = vxor.u32 %v231, %v232
    %v234 = vmul.u32 %v233, 3266489909
    %v235 = vshrl.u32 %v234, 16
    %v236 = vxor.u32 %v234, %v235
    %v237 = vshrl.u32 %v236, 8
    %vm238 = vcmp.ge.s32.totalorder %v237, 3355443
    %v239 = vsel %vm238, %v215, 0.0
    %v240 = vpack.c.bf16 %v239, %v239
    %v241 = vld [vmem:[#allocation7] sm:$0xf]
    %v242 = vld [vmem:[#allocation7 + $0x4] sm:$0xf]
    %v243 = vld [vmem:[#allocation7 + $0x8] sm:$0xf]
    %v244 = vld [vmem:[#allocation7 + $0xc] sm:$0xf]
    %v245 = vld [vmem:[#allocation7 + $0x10] sm:$0xf]
    %v246 = vld [vmem:[#allocation7 + $0x14] sm:$0xf]
    %v247 = vld [vmem:[#allocation7 + $0x18] sm:$0xf]
    %v248 = vld [vmem:[#allocation7 + $0x1c] sm:$0xf]
    %v249 = vld [vmem:[%s7] sm:$0x1]
    %v251 = vlaneseq
    %v252 = vshrl.u32 %v251, 7
    %v253 = vsub.s32 0, %v252
    %v254 = vrot.slane %v249, %v253
    %v264 = vunpack.c.l.b16 %v241
    %v265 = vunpack.c.l.b16 %v242
    %v266 = vunpack.c.l.b16 %v243
    %v267 = vunpack.c.l.b16 %v244
    %v268 = vunpack.c.l.b16 %v245
    %v269 = vunpack.c.l.b16 %v246
    %v270 = vunpack.c.l.b16 %v247
    %v271 = vunpack.c.l.b16 %v248
    %v272 = vpack.c.b16 %v265, %v264
    %v273 = vpack.c.b16 %v267, %v266
    %v274 = vpack.c.b16 %v269, %v268
    %v275 = vpack.c.b16 %v271, %v270
    %v281 = vsel %vm171, %v240, 0
    %283 = vmatprep.subr.bf16.mxu0 0
    %284 = vmatpush1.bf16.msra.mxu0 %v272
    %285 = vmatprep.subr.bf16.mxu0 0
    %286 = vmatpush1.bf16.msra.mxu0 %v273
    %287 = vmatprep.subr.bf16.mxu0 0
    %288 = vmatpush1.bf16.msra.mxu0 %v274
    %289 = vmatprep.subr.bf16.mxu0 0
    %290 = vmatpush1.bf16.msra.mxu0 %v275
    %291 = vmatprep.subr.bf16.mxu0 0
    %292 = vmatpush1.bf16.msra.mxu0 0
    %293 = vmatprep.subr.bf16.mxu0 0
    %294 = vmatpush1.bf16.msra.mxu0 0
    %295 = vmatprep.subr.bf16.mxu0 0
    %296 = vmatpush1.bf16.msra.mxu0 0
    %297 = vmatprep.subr.bf16.mxu0 0
    %298 = vmatpush1.bf16.msra.mxu0 0
    %299 = vmatprep.subr.bf16.mxu0 0
    %300 = vmatpush1.bf16.msra.mxu0 0
    %301 = vmatprep.subr.bf16.mxu0 0
    %302 = vmatpush1.bf16.msra.mxu0 0
    %303 = vmatprep.subr.bf16.mxu0 0
    %304 = vmatpush1.bf16.msra.mxu0 0
    %305 = vmatprep.subr.bf16.mxu0 0
    %306 = vmatpush1.bf16.msra.mxu0 0
    %307 = vmatprep.subr.bf16.mxu0 0
    %308 = vmatpush1.bf16.msra.mxu0 0
    %309 = vmatprep.subr.bf16.mxu0 0
    %310 = vmatpush1.bf16.msra.mxu0 0
    %311 = vmatprep.subr.bf16.mxu0 0
    %312 = vmatpush1.bf16.msra.mxu0 0
    %313 = vmatprep.subr.bf16.mxu0 0
    %314 = vmatpush1.bf16.msra.mxu0 0
    %315 = vmatprep.mubr.bf16.mxu0 0
    %316 = vmatmul.mubr.bf16.gmra.mrb[0].mxu0 %v281
    %v317 = vpop.f32.mrb[0].mxu0
    %v318 = vadd.f32 %v254, %v317
    %v319 = vpop.f32.mrb[0].mxu0
    %v320 = vpop.f32.mrb[0].mxu0
    %v321 = vpop.f32.mrb[0].mxu0
    %322 = vdwg.mxu0
    %v323 = vmax.f32 %v318, 0.0
    %v324 = vpack.c.bf16 %v323, %v323
    %v325 = vld [vmem:[%s8] sm:$0xf]
    %v326 = vld [vmem:[%s8 + $0x4] sm:$0xf]
    %v327 = vld [vmem:[%s8 + $0x8] sm:$0xf]
    %v328 = vld [vmem:[%s8 + $0xc] sm:$0xf]
    %v329 = vld [vmem:[%s8 + $0x10] sm:$0xf]
    %v330 = vld [vmem:[%s8 + $0x14] sm:$0xf]
    %v331 = vld [vmem:[%s8 + $0x18] sm:$0xf]
    %v332 = vld [vmem:[%s8 + $0x1c] sm:$0xf]
    %v333 = vld [vmem:[%s9] sm:$0x1]
    %v335 = vlaneseq
    %v336 = vshrl.u32 %v335, 7
    %v337 = vsub.s32 0, %v336
    %v338 = vrot.slane %v333, %v337
    %v348 = vunpack.c.l.b16 %v325
    %v349 = vunpack.c.l.b16 %v326
    %v350 = vunpack.c.l.b16 %v327
    %v351 = vunpack.c.l.b16 %v328
    %v352 = vunpack.c.l.b16 %v329
    %v353 = vunpack.c.l.b16 %v330
    %v354 = vunpack.c.l.b16 %v331
    %v355 = vunpack.c.l.b16 %v332
    %v356 = vpack.c.b16 %v349, %v348
    %v357 = vpack.c.b16 %v351, %v350
    %v358 = vpack.c.b16 %v353, %v352
    %v359 = vpack.c.b16 %v355, %v354
    %v365 = vsel %vm171, %v324, 0
    %367 = vmatprep.subr.bf16.mxu0 0
    %368 = vmatpush1.bf16.msra.mxu0 %v356
    %369 = vmatprep.subr.bf16.mxu0 0
    %370 = vmatpush1.bf16.msra.mxu0 %v357
    %371 = vmatprep.subr.bf16.mxu0 0
    %372 = vmatpush1.bf16.msra.mxu0 %v358
    %373 = vmatprep.subr.bf16.mxu0 0
    %374 = vmatpush1.bf16.msra.mxu0 %v359
    %375 = vmatprep.subr.bf16.mxu0 0
    %376 = vmatpush1.bf16.msra.mxu0 0
    %377 = vmatprep.subr.bf16.mxu0 0
    %378 = vmatpush1.bf16.msra.mxu0 0
    %379 = vmatprep.subr.bf16.mxu0 0
    %380 = vmatpush1.bf16.msra.mxu0 0
    %381 = vmatprep.subr.bf16.mxu0 0
    %382 = vmatpush1.bf16.msra.mxu0 0
    %383 = vmatprep.subr.bf16.mxu0 0
    %384 = vmatpush1.bf16.msra.mxu0 0
    %385 = vmatprep.subr.bf16.mxu0 0
    %386 = vmatpush1.bf16.msra.mxu0 0
    %387 = vmatprep.subr.bf16.mxu0 0
    %388 = vmatpush1.bf16.msra.mxu0 0
    %389 = vmatprep.subr.bf16.mxu0 0
    %390 = vmatpush1.bf16.msra.mxu0 0
    %391 = vmatprep.subr.bf16.mxu0 0
    %392 = vmatpush1.bf16.msra.mxu0 0
    %393 = vmatprep.subr.bf16.mxu0 0
    %394 = vmatpush1.bf16.msra.mxu0 0
    %395 = vmatprep.subr.bf16.mxu0 0
    %396 = vmatpush1.bf16.msra.mxu0 0
    %397 = vmatprep.subr.bf16.mxu0 0
    %398 = vmatpush1.bf16.msra.mxu0 0
    %399 = vmatprep.mubr.bf16.mxu0 0
    %400 = vmatmul.mubr.bf16.gmra.mrb[0].mxu0 %v365
    %v401 = vpop.f32.mrb[0].mxu0
    %v402 = vadd.f32 %v338, %v401
    %v403 = vpop.f32.mrb[0].mxu0
    %v404 = vpop.f32.mrb[0].mxu0
    %v405 = vpop.f32.mrb[0].mxu0
    %406 = vdwg.mxu0
    %vm407 = vcmask 130048
    %408 = vst.msk [vmem:[#allocation9] sm:$0xff] %vm407, %v402
    // Predicated region
    $region46: #{tpu_custom_call.1} parent=1 // pred_check
      _
    $region47: #{tpu_custom_call.1} parent=1 // pred_check_branch
      %410 = sbr.rel (0) target = $region49
    $region48: #{tpu_custom_call.1} parent=1 // pred_region
      %s412 = ssub.s32 128, 128
      %413 = vsyncadd [#allocation6], %s412
      %s415 = sshll.u32 [#allocation9], 4
      %s416 = int_to_ptr.vmem [resolvable:$true] %s415
      %418 = dma.vmem_to_hbm [thread:$0]  %s416, 128, %s10, [#allocation6]
    $region49: #{tpu_custom_call.1} parent=1 // pred_fallthru
      _
    // Predicated region
    $region50: #{tpu_custom_call.1} parent=1 // pred_check
      _
    $region51: #{tpu_custom_call.1} parent=1 // pred_check_branch
      %420 = sbr.rel (0) target = $region53
    $region52: #{tpu_custom_call.1} parent=1 // pred_region
      %421 = dma.done [#allocation6], 128
    $region53: #{tpu_custom_call.1} parent=1 // pred_fallthru
      _
    %422 = vsyncpa [#allocation5], 1
    %423 = vsyncpa [#allocation8], 1
    %424 = vsyncpa [#allocation6], 1

</llo_original>
